<compile_context>
chip_gen: v6e
topology: v6e:2x2x1
jax: 0.10.0
libtpu: 0.0.40
codegen_flags: <defaults>
</compile_context>

<pallas_src>
import functools

import jax
import jax.numpy as jnp
from jax import lax
from jax.experimental import pallas as pl
from jax.experimental.pallas import tpu as pltpu


_PAD = 128   # lane padding on each side of the flattened image (lane-aligned, >= W+1)
_TAPS = tuple((dh, dw) for dh in (-1, 0, 1) for dw in (-1, 0, 1))


def _encdec_kernel(x_ref, we_ref, wd_ref, o_ref, xbuf, hbuf, pe, pd, *, H, W):
    """Fused encoder(conv3x3 + folded BN + ReLU) + decoder(conv3x3) for one batch element.

    x_ref : (1, Cin, N)          input image, flattened spatially (N = H*W on lanes)
    we_ref: (Chid, 9*Cin + 1)    encoder weights, BN scale folded, last column = bias
    wd_ref: (Ncls, 9*Chid + 1)   decoder weights, last column = bias
    o_ref : (1, Ncls, N)         output logits
    xbuf  : (Cin,  N + 2*_PAD)   VMEM scratch: zero-padded flat input
    hbuf  : (Chid, N + 2*_PAD)   VMEM scratch: zero-padded flat hidden activation
    pe    : (9*Cin + 1,  N)      VMEM scratch: encoder im2col patch matrix
    pd    : (9*Chid + 1, N)      VMEM scratch: decoder im2col patch matrix
    """
    N = H * W
    Cin = x_ref.shape[1]
    Chid = we_ref.shape[0]

    # Column (w) index of each lane.  Halo handling for the 3x3 stencil:
    #   vertical out-of-range reads land in the zeroed lane padding of {x,h}buf,
    #   horizontal out-of-range reads are masked here (a lane-only predicate).
    ww = jax.lax.broadcasted_iota(jnp.int32, (1, N), 1) % W
    left_ok = ww >= 1          # taps with dw == -1 need w - 1 >= 0
    right_ok = ww <= W - 2     # taps with dw == +1 need w + 1 <= W - 1

    def build_patches(src, patch, C):
        # patch[t*C + c, p] = image[c, p + dh*W + dw]  (0 outside the image), p = h*W + w
        for t, (dh, dw) in enumerate(_TAPS):
            start = _PAD + dh * W + dw
            piece = src[:, start:start + N]                      # (C, N), static slice
            if dw == -1:
                piece = jnp.where(left_ok, piece, 0.0)
            elif dw == 1:
                piece = jnp.where(right_ok, piece, 0.0)
            patch[t * C:(t + 1) * C, :] = piece
        patch[9 * C:9 * C + 1, :] = jnp.ones((1, N), jnp.float32)  # bias (ones) row

    # ------------------- encoder: conv3x3 + folded BN + ReLU -------------------
    xbuf[...] = jnp.zeros_like(xbuf)
    xbuf[:, _PAD:_PAD + N] = x_ref[0].astype(jnp.float32)          # lane-aligned store
    build_patches(xbuf, pe, Cin)
    h = jnp.dot(we_ref[...], pe[...].astype(we_ref.dtype),
                preferred_element_type=jnp.float32)                # (Chid, N) on MXU
    h = jnp.maximum(h, 0.0)

    # ------------------- decoder: conv3x3 + bias (logits) ----------------------
    hbuf[...] = jnp.zeros_like(hbuf)
    hbuf[:, _PAD:_PAD + N] = h
    build_patches(hbuf, pd, Chid)
    logits = jnp.dot(wd_ref[...], pd[...].astype(wd_ref.dtype),
                     preferred_element_type=jnp.float32)           # (Ncls, N) on MXU
    o_ref[...] = logits[None].astype(o_ref.dtype)                  # lane-dense store


@functools.partial(jax.jit, static_argnames=("H", "W"))
def _encdec_forward(x_nchw, w_enc_aug, w_dec_aug, *, H, W):
    B, Cin = x_nchw.shape[0], x_nchw.shape[1]
    N = H * W
    Chid = w_enc_aug.shape[0]
    Ncls = w_dec_aug.shape[0]
    assert W + 1 <= _PAD, "spatial width too large for the fixed lane padding"

    x_flat = x_nchw.reshape(B, Cin, N)        # NCHW row-major -> (B, C, H*W): no transpose

    out_flat = pl.pallas_call(
        functools.partial(_encdec_kernel, H=H, W=W),
        out_shape=jax.ShapeDtypeStruct((B, Ncls, N), jnp.float32),
        grid=(B,),
        in_specs=[
            pl.BlockSpec((1, Cin, N), lambda b: (b, 0, 0)),
            pl.BlockSpec((Chid, 9 * Cin + 1), lambda b: (0, 0)),
            pl.BlockSpec((Ncls, 9 * Chid + 1), lambda b: (0, 0)),
        ],
        out_specs=pl.BlockSpec((1, Ncls, N), lambda b: (b, 0, 0)),
        scratch_shapes=[
            pltpu.VMEM((Cin, N + 2 * _PAD), jnp.float32),
            pltpu.VMEM((Chid, N + 2 * _PAD), jnp.float32),
            pltpu.VMEM((9 * Cin + 1, N), jnp.float32),
            pltpu.VMEM((9 * Chid + 1, N), jnp.float32),
        ],
        compiler_params=pltpu.CompilerParams(
            dimension_semantics=("parallel",)),   # batch elements across v7x's 2 TCs
    )(x_flat, w_enc_aug, w_dec_aug)

    return out_flat.reshape(B, Ncls, H, W)


class EncoderDecoderPallas:
    """forward(x): x -> encoder -> decoder -> logits  (NCHW in / NCHW out)."""

    def __init__(self, cin=4, chid=8, ncls=3, seed=0, matmul_dtype=jnp.bfloat16):
        self.cin, self.chid, self.ncls = cin, chid, ncls
        self.matmul_dtype = matmul_dtype
        k_we, k_be, k_wd, k_bd = jax.random.split(jax.random.PRNGKey(seed), 4)

        # Conv2d init per Model.initialize (kaiming_normal_, fan_out, relu) and
        # PyTorch's default bias init U(-1/sqrt(fan_in), 1/sqrt(fan_in)).
        def conv_init(kw_, kb_, cout, cin_):
            std = (2.0 / (cout * 9)) ** 0.5
            w = std * jax.random.normal(kw_, (cout, cin_, 3, 3), jnp.float32)
            bound = 1.0 / (cin_ * 9) ** 0.5
            b = jax.random.uniform(kb_, (cout,), jnp.float32, -bound, bound)
            return w, b

        w_enc, b_enc = conv_init(k_we, k_be, chid, cin)
        w_dec, b_dec = conv_init(k_wd, k_bd, ncls, chid)

        # BatchNorm2d per Model.initialize: gamma=1, beta=0; eval-mode running stats.
        self.bn_gamma = jnp.ones((chid,), jnp.float32)
        self.bn_beta = jnp.zeros((chid,), jnp.float32)
        self.bn_mean = jnp.zeros((chid,), jnp.float32)
        self.bn_var = jnp.ones((chid,), jnp.float32)
        self.bn_eps = 1e-5

        # Fold BN into the encoder conv; flatten to (Cout, 9*Cin) + bias column.
        scale = self.bn_gamma / jnp.sqrt(self.bn_var + self.bn_eps)
        w_enc_folded = w_enc * scale[:, None, None, None]
        b_enc_folded = (b_enc - self.bn_mean) * scale + self.bn_beta

        def flatten_aug(w_oihw, b):
            cout, cin_ = w_oihw.shape[0], w_oihw.shape[1]
            # column index = (kh*3 + kw)*Cin + ci  -> matches the kernel's patch order
            w_flat = jnp.transpose(w_oihw, (0, 2, 3, 1)).reshape(cout, 9 * cin_)
            return jnp.concatenate([w_flat, b[:, None]], axis=1).astype(matmul_dtype)

        self.w_enc_aug = flatten_aug(w_enc_folded, b_enc_folded)
        self.w_dec_aug = flatten_aug(w_dec, b_dec)

        # Raw (unfolded) parameters for the independent pure-JAX reference.
        self._w_enc, self._b_enc = w_enc, b_enc
        self._w_dec, self._b_dec = w_dec, b_dec

    def forward(self, x_nchw):
        H, W = int(x_nchw.shape[2]), int(x_nchw.shape[3])
        return _encdec_forward(x_nchw, self.w_enc_aug, self.w_dec_aug, H=H, W=W)

    # Pure-JAX reference: explicit conv + BatchNorm (from stored buffers, so the in-kernel
    # BN fold is independently checked) + ReLU, then conv.  Inputs/params are rounded to
    # `matmul_dtype` to mirror the kernel's MXU input precision (f32 accumulation).
    def forward_ref(self, x_nchw):
        f32 = jnp.float32
        q = lambda a: a.astype(self.matmul_dtype).astype(f32)

        def conv(x, w, b):
            dn = lax.conv_dimension_numbers(x.shape, w.shape, ("NCHW", "OIHW", "NCHW"))
            y = lax.conv_general_dilated(x, w, (1, 1), "SAME", dimension_numbers=dn,
                                         precision=lax.Precision.HIGHEST)
            return y + b[None, :, None, None]

        h = conv(q(x_nchw), q(self._w_enc), q(self._b_enc))
        h = (h - self.bn_mean[None, :, None, None]) / jnp.sqrt(
            self.bn_var[None, :, None, None] + self.bn_eps)
        h = h * self.bn_gamma[None, :, None, None] + self.bn_beta[None, :, None, None]
        h = jnp.maximum(h, 0.0)
        return conv(q(h), q(self._w_dec), q(self._b_dec))


if __name__ == "__main__":
    x = jax.random.normal(jax.random.PRNGKey(0), (2, 4, 16, 16), jnp.float32)

    # Default model: bf16 matmul inputs / f32 accumulation (v6e/v7x MXU fast path).
    # Tolerance covers bf16 re-quantization of the hidden activation (expected max
    # deviation ~1e-2); structural bugs would produce errors >= 0.1.
    model = EncoderDecoderPallas(cin=4, chid=8, ncls=3, seed=0)
    out = jax.block_until_ready(model.forward(x))
    assert out.shape == (2, 3, 16, 16), out.shape
    ref = jax.block_until_ready(model.forward_ref(x))
    assert jnp.allclose(out, ref, rtol=5e-2, atol=5e-2), float(
        jnp.max(jnp.abs(out - ref)))

    # f32 variant of the same kernel code path for a tighter numerical check.
    model32 = EncoderDecoderPallas(cin=4, chid=8, ncls=3, seed=0,
                                   matmul_dtype=jnp.float32)
    out32 = jax.block_until_ready(model32.forward(x))
    ref32 = jax.block_until_ready(model32.forward_ref(x))
    assert jnp.allclose(out32, ref32, rtol=2e-2, atol=2e-2), float(
        jnp.max(jnp.abs(out32 - ref32)))

    print("KERNEL_OK")
</pallas_src>

<mosaic_0001>
module attributes {stable_mosaic.version = 11 : i64} {
  func.func @_encdec_kernel(%arg0: i32, %arg1: memref<1x4x256xf32, #tpu.memory_space<vmem>>, %arg2: memref<8x37xbf16, #tpu.memory_space<vmem>>, %arg3: memref<3x73xbf16, #tpu.memory_space<vmem>>, %arg4: memref<1x3x256xf32, #tpu.memory_space<vmem>>, %arg5: memref<4x512xf32, #tpu.memory_space<vmem>>, %arg6: memref<8x512xf32, #tpu.memory_space<vmem>>, %arg7: memref<37x256xf32, #tpu.memory_space<vmem>>, %arg8: memref<73x256xf32, #tpu.memory_space<vmem>>) attributes {dimension_semantics = [#tpu.dimension_semantics<parallel>], iteration_bounds = array<i64: 2>, scalar_prefetch = 0 : i64, scratch_operands = 4 : i64, tpu.core_type = #tpu.core_type<tc>, window_params = [{transform_indices = @transform_0, window_bounds = array<i64: 1, 4, 256>}, {pipeline_mode = #tpu.pipeline_mode<synchronous>, transform_indices = @transform_1, window_bounds = array<i64: 8, 37>}, {pipeline_mode = #tpu.pipeline_mode<synchronous>, transform_indices = @transform_2, window_bounds = array<i64: 3, 73>}, {transform_indices = @transform_3, window_bounds = array<i64: 1, 3, 256>}]} {
    %0 = tpu.iota {dimensions = array<i32: 1>} : vector<1x256xi32>
    %c16_i32 = arith.constant 16 : i32
    %c0_i32 = arith.constant 0 : i32
    %1 = arith.cmpi eq, %c16_i32, %c0_i32 : i32
    %c1_i32 = arith.constant 1 : i32
    %2 = arith.select %1, %c1_i32, %c16_i32 : i32
    %3 = vector.broadcast %2 : i32 to vector<1x256xi32>
    %4 = arith.remsi %0, %3 : vector<1x256xi32>
    %c0_i32_0 = arith.constant 0 : i32
    %5 = vector.broadcast %c0_i32_0 : i32 to vector<1x256xi32>
    %6 = arith.cmpi ne, %4, %5 : vector<1x256xi32>
    %c0_i32_1 = arith.constant 0 : i32
    %7 = vector.broadcast %c0_i32_1 : i32 to vector<1x256xi32>
    %8 = arith.cmpi slt, %4, %7 : vector<1x256xi32>
    %c0_i32_2 = arith.constant 0 : i32
    %9 = arith.cmpi slt, %2, %c0_i32_2 : i32
    %10 = vector.broadcast %9 : i1 to vector<1x256xi1>
    %11 = vector.broadcast %10 : vector<1x256xi1> to vector<1x256xi1>
    %12 = arith.xori %8, %11 : vector<1x256xi1>
    %13 = arith.andi %12, %6 : vector<1x256xi1>
    %14 = vector.broadcast %2 : i32 to vector<1x256xi32>
    %15 = arith.addi %4, %14 : vector<1x256xi32>
    %16 = arith.select %13, %15, %4 : vector<1x256xi1>, vector<1x256xi32>
    %c1_i32_3 = arith.constant 1 : i32
    %17 = vector.broadcast %c1_i32_3 : i32 to vector<1x256xi32>
    %18 = arith.cmpi sge, %16, %17 : vector<1x256xi32>
    %c14_i32 = arith.constant 14 : i32
    %19 = vector.broadcast %c14_i32 : i32 to vector<1x256xi32>
    %20 = arith.cmpi sle, %16, %19 : vector<1x256xi32>
    %cst = arith.constant 0.000000e+00 : f32
    %21 = vector.broadcast %cst : f32 to vector<4x512xf32>
    %c0 = arith.constant 0 : index
    %c0_4 = arith.constant 0 : index
    %22 = vector.load %arg5[%c0, %c0_4] : memref<4x512xf32, #tpu.memory_space<vmem>>, vector<4x512xf32>
    tpu.vector_store %arg5[%c0, %c0_4], %21 {strides = array<i32>} : memref<4x512xf32, #tpu.memory_space<vmem>>, vector<4x512xf32>,
    %c0_5 = arith.constant 0 : index
    %c0_6 = arith.constant 0 : index
    %c0_7 = arith.constant 0 : index
    %23 = vector.load %arg1[%c0_5, %c0_6, %c0_7] : memref<1x4x256xf32, #tpu.memory_space<vmem>>, vector<1x4x256xf32>
    %24 = vector.shape_cast %23 : vector<1x4x256xf32> to vector<4x256xf32>
    %c0_8 = arith.constant 0 : index
    %c128 = arith.constant 128 : index
    %25 = vector.load %arg5[%c0_8, %c128] : memref<4x512xf32, #tpu.memory_space<vmem>>, vector<4x256xf32>
    tpu.vector_store %arg5[%c0_8, %c128], %24 {strides = array<i32>} : memref<4x512xf32, #tpu.memory_space<vmem>>, vector<4x256xf32>,
    %c0_9 = arith.constant 0 : index
    %c111 = arith.constant 111 : index
    %26 = vector.load %arg5[%c0_9, %c111] : memref<4x512xf32, #tpu.memory_space<vmem>>, vector<4x256xf32>
    %cst_10 = arith.constant 0.000000e+00 : f32
    %27 = vector.shape_cast %18 : vector<1x256xi1> to vector<1x256xi1>
    %28 = vector.broadcast %27 : vector<1x256xi1> to vector<4x256xi1>
    %29 = vector.broadcast %cst_10 : f32 to vector<4x256xf32>
    %30 = arith.select %28, %26, %29 : vector<4x256xi1>, vector<4x256xf32>
    %c0_11 = arith.constant 0 : index
    %c0_12 = arith.constant 0 : index
    %31 = vector.load %arg7[%c0_11, %c0_12] : memref<37x256xf32, #tpu.memory_space<vmem>>, vector<4x256xf32>
    tpu.vector_store %arg7[%c0_11, %c0_12], %30 {strides = array<i32>} : memref<37x256xf32, #tpu.memory_space<vmem>>, vector<4x256xf32>,
    %c0_13 = arith.constant 0 : index
    %c112 = arith.constant 112 : index
    %32 = vector.load %arg5[%c0_13, %c112] : memref<4x512xf32, #tpu.memory_space<vmem>>, vector<4x256xf32>
    %c4 = arith.constant 4 : index
    %c0_14 = arith.constant 0 : index
    %33 = vector.load %arg7[%c4, %c0_14] : memref<37x256xf32, #tpu.memory_space<vmem>>, vector<4x256xf32>
    tpu.vector_store %arg7[%c4, %c0_14], %32 {strides = array<i32>} : memref<37x256xf32, #tpu.memory_space<vmem>>, vector<4x256xf32>,
    %c0_15 = arith.constant 0 : index
    %c113 = arith.constant 113 : index
    %34 = vector.load %arg5[%c0_15, %c113] : memref<4x512xf32, #tpu.memory_space<vmem>>, vector<4x256xf32>
    %cst_16 = arith.constant 0.000000e+00 : f32
    %35 = vector.shape_cast %20 : vector<1x256xi1> to vector<1x256xi1>
    %36 = vector.broadcast %35 : vector<1x256xi1> to vector<4x256xi1>
    %37 = vector.broadcast %cst_16 : f32 to vector<4x256xf32>
    %38 = arith.select %36, %34, %37 : vector<4x256xi1>, vector<4x256xf32>
    %c8 = arith.constant 8 : index
    %c0_17 = arith.constant 0 : index
    %39 = vector.load %arg7[%c8, %c0_17] : memref<37x256xf32, #tpu.memory_space<vmem>>, vector<4x256xf32>
    tpu.vector_store %arg7[%c8, %c0_17], %38 {strides = array<i32>} : memref<37x256xf32, #tpu.memory_space<vmem>>, vector<4x256xf32>,
    %c0_18 = arith.constant 0 : index
    %c127 = arith.constant 127 : index
    %40 = vector.load %arg5[%c0_18, %c127] : memref<4x512xf32, #tpu.memory_space<vmem>>, vector<4x256xf32>
    %cst_19 = arith.constant 0.000000e+00 : f32
    %41 = vector.shape_cast %18 : vector<1x256xi1> to vector<1x256xi1>
    %42 = vector.broadcast %41 : vector<1x256xi1> to vector<4x256xi1>
    %43 = vector.broadcast %cst_19 : f32 to vector<4x256xf32>
    %44 = arith.select %42, %40, %43 : vector<4x256xi1>, vector<4x256xf32>
    %c12 = arith.constant 12 : index
    %c0_20 = arith.constant 0 : index
    %45 = vector.load %arg7[%c12, %c0_20] : memref<37x256xf32, #tpu.memory_space<vmem>>, vector<4x256xf32>
    tpu.vector_store %arg7[%c12, %c0_20], %44 {strides = array<i32>} : memref<37x256xf32, #tpu.memory_space<vmem>>, vector<4x256xf32>,
    %c0_21 = arith.constant 0 : index
    %c128_22 = arith.constant 128 : index
    %46 = vector.load %arg5[%c0_21, %c128_22] : memref<4x512xf32, #tpu.memory_space<vmem>>, vector<4x256xf32>
    %c16 = arith.constant 16 : index
    %c0_23 = arith.constant 0 : index
    %47 = vector.load %arg7[%c16, %c0_23] : memref<37x256xf32, #tpu.memory_space<vmem>>, vector<4x256xf32>
    tpu.vector_store %arg7[%c16, %c0_23], %46 {strides = array<i32>} : memref<37x256xf32, #tpu.memory_space<vmem>>, vector<4x256xf32>,
    %c0_24 = arith.constant 0 : index
    %c129 = arith.constant 129 : index
    %48 = vector.load %arg5[%c0_24, %c129] : memref<4x512xf32, #tpu.memory_space<vmem>>, vector<4x256xf32>
    %cst_25 = arith.constant 0.000000e+00 : f32
    %49 = vector.shape_cast %20 : vector<1x256xi1> to vector<1x256xi1>
    %50 = vector.broadcast %49 : vector<1x256xi1> to vector<4x256xi1>
    %51 = vector.broadcast %cst_25 : f32 to vector<4x256xf32>
    %52 = arith.select %50, %48, %51 : vector<4x256xi1>, vector<4x256xf32>
    %c20 = arith.constant 20 : index
    %c0_26 = arith.constant 0 : index
    %53 = vector.load %arg7[%c20, %c0_26] : memref<37x256xf32, #tpu.memory_space<vmem>>, vector<4x256xf32>
    tpu.vector_store %arg7[%c20, %c0_26], %52 {strides = array<i32>} : memref<37x256xf32, #tpu.memory_space<vmem>>, vector<4x256xf32>,
    %c0_27 = arith.constant 0 : index
    %c143 = arith.constant 143 : index
    %54 = vector.load %arg5[%c0_27, %c143] : memref<4x512xf32, #tpu.memory_space<vmem>>, vector<4x256xf32>
    %cst_28 = arith.constant 0.000000e+00 : f32
    %55 = vector.shape_cast %18 : vector<1x256xi1> to vector<1x256xi1>
    %56 = vector.broadcast %55 : vector<1x256xi1> to vector<4x256xi1>
    %57 = vector.broadcast %cst_28 : f32 to vector<4x256xf32>
    %58 = arith.select %56, %54, %57 : vector<4x256xi1>, vector<4x256xf32>
    %c24 = arith.constant 24 : index
    %c0_29 = arith.constant 0 : index
    %59 = vector.load %arg7[%c24, %c0_29] : memref<37x256xf32, #tpu.memory_space<vmem>>, vector<4x256xf32>
    tpu.vector_store %arg7[%c24, %c0_29], %58 {strides = array<i32>} : memref<37x256xf32, #tpu.memory_space<vmem>>, vector<4x256xf32>,
    %c0_30 = arith.constant 0 : index
    %c144 = arith.constant 144 : index
    %60 = vector.load %arg5[%c0_30, %c144] : memref<4x512xf32, #tpu.memory_space<vmem>>, vector<4x256xf32>
    %c28 = arith.constant 28 : index
    %c0_31 = arith.constant 0 : index
    %61 = vector.load %arg7[%c28, %c0_31] : memref<37x256xf32, #tpu.memory_space<vmem>>, vector<4x256xf32>
    tpu.vector_store %arg7[%c28, %c0_31], %60 {strides = array<i32>} : memref<37x256xf32, #tpu.memory_space<vmem>>, vector<4x256xf32>,
    %c0_32 = arith.constant 0 : index
    %c145 = arith.constant 145 : index
    %62 = vector.load %arg5[%c0_32, %c145] : memref<4x512xf32, #tpu.memory_space<vmem>>, vector<4x256xf32>
    %cst_33 = arith.constant 0.000000e+00 : f32
    %63 = vector.shape_cast %20 : vector<1x256xi1> to vector<1x256xi1>
    %64 = vector.broadcast %63 : vector<1x256xi1> to vector<4x256xi1>
    %65 = vector.broadcast %cst_33 : f32 to vector<4x256xf32>
    %66 = arith.select %64, %62, %65 : vector<4x256xi1>, vector<4x256xf32>
    %c32 = arith.constant 32 : index
    %c0_34 = arith.constant 0 : index
    %67 = vector.load %arg7[%c32, %c0_34] : memref<37x256xf32, #tpu.memory_space<vmem>>, vector<4x256xf32>
    tpu.vector_store %arg7[%c32, %c0_34], %66 {strides = array<i32>} : memref<37x256xf32, #tpu.memory_space<vmem>>, vector<4x256xf32>,
    %cst_35 = arith.constant 1.000000e+00 : f32
    %68 = vector.broadcast %cst_35 : f32 to vector<1x256xf32>
    %c36 = arith.constant 36 : index
    %c0_36 = arith.constant 0 : index
    %69 = vector.load %arg7[%c36, %c0_36] : memref<37x256xf32, #tpu.memory_space<vmem>>, vector<1x256xf32>
    tpu.vector_store %arg7[%c36, %c0_36], %68 {strides = array<i32>} : memref<37x256xf32, #tpu.memory_space<vmem>>, vector<1x256xf32>,
    %c0_37 = arith.constant 0 : index
    %c0_38 = arith.constant 0 : index
    %70 = vector.load %arg2[%c0_37, %c0_38] : memref<8x37xbf16, #tpu.memory_space<vmem>>, vector<8x37xbf16>
    %c0_39 = arith.constant 0 : index
    %c0_40 = arith.constant 0 : index
    %71 = vector.load %arg7[%c0_39, %c0_40] : memref<37x256xf32, #tpu.memory_space<vmem>>, vector<37x256xf32>
    %72 = arith.truncf %71 : vector<37x256xf32> to vector<37x256xbf16>
    %cst_41 = arith.constant dense<0.000000e+00> : vector<8x256xf32>
    %73 = tpu.matmul %70, %72, %cst_41 {dimension_numbers = #tpu.dot_dimension_numbers<[1], [0], [0], [1], [0, 0, 1, 1], [], []>} : vector<8x37xbf16>, vector<37x256xbf16>, vector<8x256xf32> -> vector<8x256xf32>
    %cst_42 = arith.constant 0.000000e+00 : f32
    %74 = vector.broadcast %cst_42 : f32 to vector<8x256xf32>
    %75 = arith.maximumf %73, %74 : vector<8x256xf32>
    %cst_43 = arith.constant 0.000000e+00 : f32
    %76 = vector.broadcast %cst_43 : f32 to vector<8x512xf32>
    %c0_44 = arith.constant 0 : index
    %c0_45 = arith.constant 0 : index
    %77 = vector.load %arg6[%c0_44, %c0_45] : memref<8x512xf32, #tpu.memory_space<vmem>>, vector<8x512xf32>
    tpu.vector_store %arg6[%c0_44, %c0_45], %76 {strides = array<i32>} : memref<8x512xf32, #tpu.memory_space<vmem>>, vector<8x512xf32>,
    %c0_46 = arith.constant 0 : index
    %c128_47 = arith.constant 128 : index
    %78 = vector.load %arg6[%c0_46, %c128_47] : memref<8x512xf32, #tpu.memory_space<vmem>>, vector<8x256xf32>
    tpu.vector_store %arg6[%c0_46, %c128_47], %75 {strides = array<i32>} : memref<8x512xf32, #tpu.memory_space<vmem>>, vector<8x256xf32>,
    %c0_48 = arith.constant 0 : index
    %c111_49 = arith.constant 111 : index
    %79 = vector.load %arg6[%c0_48, %c111_49] : memref<8x512xf32, #tpu.memory_space<vmem>>, vector<8x256xf32>
    %cst_50 = arith.constant 0.000000e+00 : f32
    %80 = vector.shape_cast %18 : vector<1x256xi1> to vector<1x256xi1>
    %81 = vector.broadcast %80 : vector<1x256xi1> to vector<8x256xi1>
    %82 = vector.broadcast %cst_50 : f32 to vector<8x256xf32>
    %83 = arith.select %81, %79, %82 : vector<8x256xi1>, vector<8x256xf32>
    %c0_51 = arith.constant 0 : index
    %c0_52 = arith.constant 0 : index
    %84 = vector.load %arg8[%c0_51, %c0_52] : memref<73x256xf32, #tpu.memory_space<vmem>>, vector<8x256xf32>
    tpu.vector_store %arg8[%c0_51, %c0_52], %83 {strides = array<i32>} : memref<73x256xf32, #tpu.memory_space<vmem>>, vector<8x256xf32>,
    %c0_53 = arith.constant 0 : index
    %c112_54 = arith.constant 112 : index
    %85 = vector.load %arg6[%c0_53, %c112_54] : memref<8x512xf32, #tpu.memory_space<vmem>>, vector<8x256xf32>
    %c8_55 = arith.constant 8 : index
    %c0_56 = arith.constant 0 : index
    %86 = vector.load %arg8[%c8_55, %c0_56] : memref<73x256xf32, #tpu.memory_space<vmem>>, vector<8x256xf32>
    tpu.vector_store %arg8[%c8_55, %c0_56], %85 {strides = array<i32>} : memref<73x256xf32, #tpu.memory_space<vmem>>, vector<8x256xf32>,
    %c0_57 = arith.constant 0 : index
    %c113_58 = arith.constant 113 : index
    %87 = vector.load %arg6[%c0_57, %c113_58] : memref<8x512xf32, #tpu.memory_space<vmem>>, vector<8x256xf32>
    %cst_59 = arith.constant 0.000000e+00 : f32
    %88 = vector.shape_cast %20 : vector<1x256xi1> to vector<1x256xi1>
    %89 = vector.broadcast %88 : vector<1x256xi1> to vector<8x256xi1>
    %90 = vector.broadcast %cst_59 : f32 to vector<8x256xf32>
    %91 = arith.select %89, %87, %90 : vector<8x256xi1>, vector<8x256xf32>
    %c16_60 = arith.constant 16 : index
    %c0_61 = arith.constant 0 : index
    %92 = vector.load %arg8[%c16_60, %c0_61] : memref<73x256xf32, #tpu.memory_space<vmem>>, vector<8x256xf32>
    tpu.vector_store %arg8[%c16_60, %c0_61], %91 {strides = array<i32>} : memref<73x256xf32, #tpu.memory_space<vmem>>, vector<8x256xf32>,
    %c0_62 = arith.constant 0 : index
    %c127_63 = arith.constant 127 : index
    %93 = vector.load %arg6[%c0_62, %c127_63] : memref<8x512xf32, #tpu.memory_space<vmem>>, vector<8x256xf32>
    %cst_64 = arith.constant 0.000000e+00 : f32
    %94 = vector.shape_cast %18 : vector<1x256xi1> to vector<1x256xi1>
    %95 = vector.broadcast %94 : vector<1x256xi1> to vector<8x256xi1>
    %96 = vector.broadcast %cst_64 : f32 to vector<8x256xf32>
    %97 = arith.select %95, %93, %96 : vector<8x256xi1>, vector<8x256xf32>
    %c24_65 = arith.constant 24 : index
    %c0_66 = arith.constant 0 : index
    %98 = vector.load %arg8[%c24_65, %c0_66] : memref<73x256xf32, #tpu.memory_space<vmem>>, vector<8x256xf32>
    tpu.vector_store %arg8[%c24_65, %c0_66], %97 {strides = array<i32>} : memref<73x256xf32, #tpu.memory_space<vmem>>, vector<8x256xf32>,
    %c0_67 = arith.constant 0 : index
    %c128_68 = arith.constant 128 : index
    %99 = vector.load %arg6[%c0_67, %c128_68] : memref<8x512xf32, #tpu.memory_space<vmem>>, vector<8x256xf32>
    %c32_69 = arith.constant 32 : index
    %c0_70 = arith.constant 0 : index
    %100 = vector.load %arg8[%c32_69, %c0_70] : memref<73x256xf32, #tpu.memory_space<vmem>>, vector<8x256xf32>
    tpu.vector_store %arg8[%c32_69, %c0_70], %99 {strides = array<i32>} : memref<73x256xf32, #tpu.memory_space<vmem>>, vector<8x256xf32>,
    %c0_71 = arith.constant 0 : index
    %c129_72 = arith.constant 129 : index
    %101 = vector.load %arg6[%c0_71, %c129_72] : memref<8x512xf32, #tpu.memory_space<vmem>>, vector<8x256xf32>
    %cst_73 = arith.constant 0.000000e+00 : f32
    %102 = vector.shape_cast %20 : vector<1x256xi1> to vector<1x256xi1>
    %103 = vector.broadcast %102 : vector<1x256xi1> to vector<8x256xi1>
    %104 = vector.broadcast %cst_73 : f32 to vector<8x256xf32>
    %105 = arith.select %103, %101, %104 : vector<8x256xi1>, vector<8x256xf32>
    %c40 = arith.constant 40 : index
    %c0_74 = arith.constant 0 : index
    %106 = vector.load %arg8[%c40, %c0_74] : memref<73x256xf32, #tpu.memory_space<vmem>>, vector<8x256xf32>
    tpu.vector_store %arg8[%c40, %c0_74], %105 {strides = array<i32>} : memref<73x256xf32, #tpu.memory_space<vmem>>, vector<8x256xf32>,
    %c0_75 = arith.constant 0 : index
    %c143_76 = arith.constant 143 : index
    %107 = vector.load %arg6[%c0_75, %c143_76] : memref<8x512xf32, #tpu.memory_space<vmem>>, vector<8x256xf32>
    %cst_77 = arith.constant 0.000000e+00 : f32
    %108 = vector.shape_cast %18 : vector<1x256xi1> to vector<1x256xi1>
    %109 = vector.broadcast %108 : vector<1x256xi1> to vector<8x256xi1>
    %110 = vector.broadcast %cst_77 : f32 to vector<8x256xf32>
    %111 = arith.select %109, %107, %110 : vector<8x256xi1>, vector<8x256xf32>
    %c48 = arith.constant 48 : index
    %c0_78 = arith.constant 0 : index
    %112 = vector.load %arg8[%c48, %c0_78] : memref<73x256xf32, #tpu.memory_space<vmem>>, vector<8x256xf32>
    tpu.vector_store %arg8[%c48, %c0_78], %111 {strides = array<i32>} : memref<73x256xf32, #tpu.memory_space<vmem>>, vector<8x256xf32>,
    %c0_79 = arith.constant 0 : index
    %c144_80 = arith.constant 144 : index
    %113 = vector.load %arg6[%c0_79, %c144_80] : memref<8x512xf32, #tpu.memory_space<vmem>>, vector<8x256xf32>
    %c56 = arith.constant 56 : index
    %c0_81 = arith.constant 0 : index
    %114 = vector.load %arg8[%c56, %c0_81] : memref<73x256xf32, #tpu.memory_space<vmem>>, vector<8x256xf32>
    tpu.vector_store %arg8[%c56, %c0_81], %113 {strides = array<i32>} : memref<73x256xf32, #tpu.memory_space<vmem>>, vector<8x256xf32>,
    %c0_82 = arith.constant 0 : index
    %c145_83 = arith.constant 145 : index
    %115 = vector.load %arg6[%c0_82, %c145_83] : memref<8x512xf32, #tpu.memory_space<vmem>>, vector<8x256xf32>
    %cst_84 = arith.constant 0.000000e+00 : f32
    %116 = vector.shape_cast %20 : vector<1x256xi1> to vector<1x256xi1>
    %117 = vector.broadcast %116 : vector<1x256xi1> to vector<8x256xi1>
    %118 = vector.broadcast %cst_84 : f32 to vector<8x256xf32>
    %119 = arith.select %117, %115, %118 : vector<8x256xi1>, vector<8x256xf32>
    %c64 = arith.constant 64 : index
    %c0_85 = arith.constant 0 : index
    %120 = vector.load %arg8[%c64, %c0_85] : memref<73x256xf32, #tpu.memory_space<vmem>>, vector<8x256xf32>
    tpu.vector_store %arg8[%c64, %c0_85], %119 {strides = array<i32>} : memref<73x256xf32, #tpu.memory_space<vmem>>, vector<8x256xf32>,
    %cst_86 = arith.constant 1.000000e+00 : f32
    %121 = vector.broadcast %cst_86 : f32 to vector<1x256xf32>
    %c72 = arith.constant 72 : index
    %c0_87 = arith.constant 0 : index
    %122 = vector.load %arg8[%c72, %c0_87] : memref<73x256xf32, #tpu.memory_space<vmem>>, vector<1x256xf32>
    tpu.vector_store %arg8[%c72, %c0_87], %121 {strides = array<i32>} : memref<73x256xf32, #tpu.memory_space<vmem>>, vector<1x256xf32>,
    %c0_88 = arith.constant 0 : index
    %c0_89 = arith.constant 0 : index
    %123 = vector.load %arg3[%c0_88, %c0_89] : memref<3x73xbf16, #tpu.memory_space<vmem>>, vector<3x73xbf16>
    %c0_90 = arith.constant 0 : index
    %c0_91 = arith.constant 0 : index
    %124 = vector.load %arg8[%c0_90, %c0_91] : memref<73x256xf32, #tpu.memory_space<vmem>>, vector<73x256xf32>
    %125 = arith.truncf %124 : vector<73x256xf32> to vector<73x256xbf16>
    %cst_92 = arith.constant dense<0.000000e+00> : vector<3x256xf32>
    %126 = tpu.matmul %123, %125, %cst_92 {dimension_numbers = #tpu.dot_dimension_numbers<[1], [0], [0], [1], [0, 0, 1, 1], [], []>} : vector<3x73xbf16>, vector<73x256xbf16>, vector<3x256xf32> -> vector<3x256xf32>
    %127 = vector.shape_cast %126 : vector<3x256xf32> to vector<1x3x256xf32>
    %c0_93 = arith.constant 0 : index
    %c0_94 = arith.constant 0 : index
    %c0_95 = arith.constant 0 : index
    %128 = vector.load %arg4[%c0_93, %c0_94, %c0_95] : memref<1x3x256xf32, #tpu.memory_space<vmem>>, vector<1x3x256xf32>
    tpu.vector_store %arg4[%c0_93, %c0_94, %c0_95], %127 {strides = array<i32>} : memref<1x3x256xf32, #tpu.memory_space<vmem>>, vector<1x3x256xf32>,
    return
  }
  func.func @transform_0(%arg0: i32) -> (i32, i32, i32) {
    %c0_i32 = arith.constant 0 : i32
    %c0_i32_0 = arith.constant 0 : i32
    %c0_i32_1 = arith.constant 0 : i32
    return %arg0, %c0_i32, %c0_i32_0 : i32, i32, i32
  }
  func.func @transform_1(%arg0: i32) -> (i32, i32) {
    %c0_i32 = arith.constant 0 : i32
    %c0_i32_0 = arith.constant 0 : i32
    %c0_i32_1 = arith.constant 0 : i32
    return %c0_i32, %c0_i32_0 : i32, i32
  }
  func.func @transform_2(%arg0: i32) -> (i32, i32) {
    %c0_i32 = arith.constant 0 : i32
    %c0_i32_0 = arith.constant 0 : i32
    %c0_i32_1 = arith.constant 0 : i32
    return %c0_i32, %c0_i32_0 : i32, i32
  }
  func.func @transform_3(%arg0: i32) -> (i32, i32, i32) {
    %c0_i32 = arith.constant 0 : i32
    %c0_i32_0 = arith.constant 0 : i32
    %c0_i32_1 = arith.constant 0 : i32
    return %arg0, %c0_i32, %c0_i32_0 : i32, i32, i32
  }
}

</mosaic_0001>

<llo_original>
// kernel: _encdec_forward.1
$region0: #{_encdec_forward.1}
  #allocation0 [shape = 'u32[]', space=smem, size = 0x4, offset = 0x4, fixed_abs, tag = 'smem constant byte address 0x4 - core index']
  #allocation1 [shape = 'u32[144,128]{1,0:T(1,128)}', space=vmem, size = 0x12000, scoped, tag = 'internal scratch']
  #allocation2 [shape = 'f32[4,512]{1,0:T(4,128)}', space=vmem, size = 0x2000, scoped, tag = 'scratch operand']
  #allocation3 [shape = 'f32[8,512]{1,0:T(8,128)}', space=vmem, size = 0x4000, scoped, tag = 'scratch operand']
  #allocation4 [shape = 'f32[37,256]{1,0:T(8,128)}', space=vmem, size = 0xa000, scoped, tag = 'scratch operand']
  #allocation5 [shape = 'f32[73,256]{1,0:T(8,128)}', space=vmem, size = 0x14000, scoped, tag = 'scratch operand']
  %s0 = inlined_call_operand.vmem [shape: f32[2,4,256], index: 0, kind: input, shape index: {}]
  %s1 = inlined_call_operand.vmem [shape: bf16[8,37], index: 1, kind: input, shape index: {}]
  %s2 = inlined_call_operand.vmem [shape: bf16[3,73], index: 2, kind: input, shape index: {}]
  %s3 = inlined_call_operand.vmem [shape: f32[2,3,256], index: 3, kind: output, shape index: {}]
  %s4 = sld [smem:[#allocation0]]
  $region45: #{_encdec_forward.1} parent=0
    _
  %s6 = ssub.s32 1, %s4
  %s7 = scalar_select 0, %s6, %s4
  loop: start=0, step=1, limit=4
  $region2: #{_encdec_forward.1} parent=0 // loop_pre_header
    _
  $region3: #{_encdec_forward.1} parent=0 // loop_header
    %s9 = sphi 0, %s13
    %p10 = scmp.ge.s32.totalorder %s9, 4
    %s19 = sphi 0, %s21
    %s22 = sphi 0, %s19
    %s23 = sphi 0, %s22
    %s39 = sphi 0, %s23
    %s43 = sphi 0, %s43
    %s45 = sphi 0, %s43
    %s46 = sphi 0, %s45
    %s60 = sphi 0, %s46
    %s64 = sphi 0, %s64
    %s66 = sphi 0, %s64
    %s67 = sphi 0, %s66
    %s81 = sphi 0, %s67
    %s87 = sphi 0, %s89
    %s90 = sphi 0, %s87
    %s91 = sphi 0, %s90
    %s107 = sphi 0, %s91
  $region4: #{_encdec_forward.1} parent=0 // loop_header_branch
    %12 = sbr.rel (%p10) target = $region8
  $region5: #{_encdec_forward.1} parent=0 // loop_body
    %s14 = ssub.s32 %s9, 1
    %s15 = ssub.s32 %s9, 2
    %s16 = sadd.s32 %s9, 1
    %s17 = ssub.s32 %s9, %s16
    %p18 = scmp.eq.s32.totalorder %s17, 0
    %s20 = sadd.s32 %s19, 1
    %s21 = scalar_select %p18, %s19, %s20
    %p24 = pneg %p18
    %p25 = scmp.eq.s32.totalorder %s9, 1
    %p26 = por %p24, %p25
    %p27 = scmp.ne.s32.totalorder %s19, %s22
    %p28 = scmp.eq.s32.totalorder %s9, 0
    %p29 = por %p27, %p28
    %p30 = scmp.ne.s32.totalorder %s19, %s22
    %p31 = scmp.eq.s32.totalorder %s14, 1
    %p32 = por %p30, %p31
    %p33 = scmp.ne.s32.totalorder %s22, %s23
    %p34 = scmp.eq.s32.totalorder %s14, 0
    %p35 = por %p33, %p34
    %p36 = scmp.ne.s32.totalorder %s22, %s23
    %p37 = scmp.eq.s32.totalorder %s15, 1
    %p38 = por %p36, %p37
    %p40 = scmp.ne.s32.totalorder %s23, %s39
    %p41 = scmp.eq.s32.totalorder %s15, 0
    %p42 = por %p40, %p41
    %s44 = sadd.s32 %s43, 1
    %p47 = scmp.eq.s32.totalorder %s9, 1
    %p48 = scmp.ne.s32.totalorder %s43, %s45
    %p49 = scmp.eq.s32.totalorder %s9, 0
    %p50 = por %p48, %p49
    %p51 = scmp.ne.s32.totalorder %s43, %s45
    %p52 = scmp.eq.s32.totalorder %s14, 1
    %p53 = por %p51, %p52
    %p54 = scmp.ne.s32.totalorder %s45, %s46
    %p55 = scmp.eq.s32.totalorder %s14, 0
    %p56 = por %p54, %p55
    %p57 = scmp.ne.s32.totalorder %s45, %s46
    %p58 = scmp.eq.s32.totalorder %s15, 1
    %p59 = por %p57, %p58
    %p61 = scmp.ne.s32.totalorder %s46, %s60
    %p62 = scmp.eq.s32.totalorder %s15, 0
    %p63 = por %p61, %p62
    %s65 = sadd.s32 %s64, 1
    %p68 = scmp.eq.s32.totalorder %s9, 1
    %p69 = scmp.ne.s32.totalorder %s64, %s66
    %p70 = scmp.eq.s32.totalorder %s9, 0
    %p71 = por %p69, %p70
    %p72 = scmp.ne.s32.totalorder %s64, %s66
    %p73 = scmp.eq.s32.totalorder %s14, 1
    %p74 = por %p72, %p73
    %p75 = scmp.ne.s32.totalorder %s66, %s67
    %p76 = scmp.eq.s32.totalorder %s14, 0
    %p77 = por %p75, %p76
    %p78 = scmp.ne.s32.totalorder %s66, %s67
    %p79 = scmp.eq.s32.totalorder %s15, 1
    %p80 = por %p78, %p79
    %p82 = scmp.ne.s32.totalorder %s67, %s81
    %p83 = scmp.eq.s32.totalorder %s15, 0
    %p84 = por %p82, %p83
    %s85 = ssub.s32 %s9, %s16
    %p86 = scmp.eq.s32.totalorder %s85, 0
    %s88 = sadd.s32 %s87, 1
    %s89 = scalar_select %p86, %s87, %s88
    %p92 = pneg %p86
    %p93 = scmp.eq.s32.totalorder %s9, 1
    %p94 = por %p92, %p93
    %p95 = scmp.ne.s32.totalorder %s87, %s90
    %p96 = scmp.eq.s32.totalorder %s9, 0
    %p97 = por %p95, %p96
    %p98 = scmp.ne.s32.totalorder %s87, %s90
    %p99 = scmp.eq.s32.totalorder %s14, 1
    %p100 = por %p98, %p99
    %p101 = scmp.ne.s32.totalorder %s90, %s91
    %p102 = scmp.eq.s32.totalorder %s14, 0
    %p103 = por %p101, %p102
    %p104 = scmp.ne.s32.totalorder %s90, %s91
    %p105 = scmp.eq.s32.totalorder %s15, 1
    %p106 = por %p104, %p105
    %p108 = scmp.ne.s32.totalorder %s91, %s107
    %p109 = scmp.eq.s32.totalorder %s15, 0
    %p110 = por %p108, %p109
    %p111 = scmp.le.s32.totalorder 1, %s9
    %p112 = scmp.lt.s32.totalorder %s9, 3
    %p113 = pnand %p111, %p112
    %p114 = pneg %p113
    // Predicated region
    $region9: #{_encdec_forward.1} parent=5 // pred_check
      _
    $region10: #{_encdec_forward.1} parent=5 // pred_check_branch
      %116 = sbr.rel (%p113) target = $region12
    $region11: #{_encdec_forward.1} parent=5 // pred_region
      %s117 = ssub.s32 %s9, 1
      // Predicated region
      $region13: #{_encdec_forward.1} parent=11 // pred_check
        %p118 = pneg %p56
      $region14: #{_encdec_forward.1} parent=11 // pred_check_branch
        %120 = sbr.rel (%p118) target = $region16
      $region15: #{_encdec_forward.1} parent=11 // pred_region
        _
      $region16: #{_encdec_forward.1} parent=11 // pred_fallthru
        _
      // Predicated region
      $region17: #{_encdec_forward.1} parent=11 // pred_check
        %p121 = pneg %p77
      $region18: #{_encdec_forward.1} parent=11 // pred_check_branch
        %123 = sbr.rel (%p121) target = $region20
      $region19: #{_encdec_forward.1} parent=11 // pred_region
        _
      $region20: #{_encdec_forward.1} parent=11 // pred_fallthru
        _
    $region12: #{_encdec_forward.1} parent=5 // pred_fallthru
      _
    %p124 = scmp.lt.s32.totalorder %s9, 2
    // Predicated region
    $region21: #{_encdec_forward.1} parent=5 // pred_check
      %p125 = pneg %p124
    $region22: #{_encdec_forward.1} parent=5 // pred_check_branch
      %127 = sbr.rel (%p125) target = $region24
    $region23: #{_encdec_forward.1} parent=5 // pred_region
      // Predicated region
      $region25: #{_encdec_forward.1} parent=23 // pred_check
        %p128 = pneg %p29
      $region26: #{_encdec_forward.1} parent=23 // pred_check_branch
        %130 = sbr.rel (%p128) target = $region28
      $region27: #{_encdec_forward.1} parent=23 // pred_region
        %p131 = scmp.lt.s32.totalorder %s9, 1
        %s132 = scalar_select %p131, %s9, 1
        %s133 = smul.addr %s132, 2
        %s134 = smul.addr %s133, 4
        %s135 = scalar_lea.vmem %s0, %s134
      $region28: #{_encdec_forward.1} parent=23 // pred_fallthru
        _
    $region24: #{_encdec_forward.1} parent=5 // pred_fallthru
      _
    %p136 = scmp.le.s32.totalorder 1, %s9
    %p137 = scmp.lt.s32.totalorder %s9, 3
    %p138 = pnand %p136, %p137
    %p139 = pneg %p138
    // Predicated region
    $region29: #{_encdec_forward.1} parent=5 // pred_check
      _
    $region30: #{_encdec_forward.1} parent=5 // pred_check_branch
      %141 = sbr.rel (%p138) target = $region32
    $region31: #{_encdec_forward.1} parent=5 // pred_region
      %s142 = ssub.s32 %s9, 1
      %p143 = scmp.lt.s32.totalorder %s14, 1
      %s144 = scalar_select %p143, %s14, 1
      %s145 = smul.addr %s144, 2
      %s146 = smul.addr %s145, 4
      %s147 = scalar_lea.vmem %s0, %s146
      %p148 = pneg %p35
      %p149 = pneg %p32
      %p150 = pneg %p56
      %p151 = pneg %p53
      %p152 = pneg %p77
      %p153 = pneg %p74
      %p154 = pneg %p103
      %p155 = pneg %p100
      %p156 = scmp.lt.s32.totalorder %s14, 1
      %s157 = scalar_select %p156, %s14, 1
      %s158 = smul.addr %s157, 2
      %s159 = smul.addr %s158, 4
      %s160 = scalar_lea.vmem %s3, %s159
      %p161 = scmp.lt.s32.totalorder %s14, 1
      %s162 = scalar_select %p161, %s14, 1
      %s163 = smul.addr %s162, 2
      %s164 = smul.addr %s163, 4
      %s165 = scalar_lea.vmem %s0, %s164
      %p166 = scmp.lt.s32.totalorder %s14, 1
      %s167 = scalar_select %p166, %s14, 1
      %s168 = smul.addr %s167, 2
      %s169 = smul.addr %s168, 4
      %s170 = scalar_lea.vmem %s3, %s169
      %v172 = vlaneseq
      %v173 = vand.u32 %v172, 127
      %v174 = vadd.s32 %v173, 128
      %vm175 = vcmp.lt.s32.totalorder %v173, 0
      %v176 = vsub.s32 0, %v173
      %v177 = vsel %vm175, %v176, %v173
      %v178 = vshrl.u32 %v177, 4
      %v179 = vand.u32 %v177, 15
      %v180 = vsub.s32 0, %v179
      %v181 = vsel %vm175, %v180, %v179
      %vm182 = vcmp.lt.s32.totalorder %v174, 0
      %v183 = vsub.s32 0, %v174
      %v184 = vsel %vm182, %v183, %v174
      %v185 = vshrl.u32 %v184, 4
      %v186 = vand.u32 %v184, 15
      %v187 = vsub.s32 0, %v186
      %v188 = vsel %vm182, %v187, %v186
      %vm189 = vcmp.ne.s32.totalorder %v181, 0
      %vm190 = vcmp.ne.s32.totalorder %v188, 0
      %vm191 = vcmp.lt.s32.totalorder %v181, 0
      %vm192 = vcmp.lt.s32.totalorder %v188, 0
      %vm193 = vmand %vm191, %vm189
      %vm194 = vmand %vm192, %vm190
      %v195 = vadd.s32 %v181, 16
      %v196 = vadd.s32 %v188, 16
      %v197 = vsel %vm193, %v195, %v181
      %v198 = vsel %vm194, %v196, %v188
      %vm199 = vcmp.ge.s32.totalorder %v197, 1
      %vm200 = vcmp.ge.s32.totalorder %v198, 1
      %vm201 = vcmp.le.s32.totalorder %v197, 14
      %vm202 = vcmp.le.s32.totalorder %v198, 14
      %203 = vst [vmem:[#allocation2] sm:$0xff] 0.0
      %204 = vst [vmem:[#allocation2 + $0x8] sm:$0xff] 0.0
      %v205 = vld [vmem:[%s165] sm:$0xff]
      %206 = vst [vmem:[#allocation2 + $0x4] sm:$0xff] %v205
      %v207 = vld [vmem:[#allocation2] sm:$0xff]
      %v208 = vld [vmem:[#allocation2 + $0x8] sm:$0xf]
      %v209 = vsel %vm199, 1, 0
      %v210 = vsel %vm200, 1, 0
      %vm211 = vcmp.eq.s32.totalorder %v209, 1
      %vm212 = vcmp.eq.s32.totalorder %v210, 1
      %v215 = vcombine.high %v207, %v207
      %216 = vrot.lane.b32.xlu0 %v207, 17
      %v217 = vpop.permute.xlu0 %216
      %218 = vrot.lane.b32.xlu0 %v215, 17
      %v219 = vpop.permute.xlu0 %218
      %220 = vrot.lane.b32.xlu0 %v208, 17
      %v221 = vpop.permute.xlu0 %220
      %vm222 = vcmask 138240
      %v223 = vsel %vm222, %v217, %v219
      %v224 = vsel %vm222, %v219, %v221
      %v227 = vsel %vm211, %v223, 0.0
      %v228 = vsel %vm212, %v224, 0.0
      %229 = vst [vmem:[#allocation4] sm:$0xf] %v227
      %230 = vst [vmem:[#allocation4 + $0x8] sm:$0xf] %v228
      %v231 = vld [vmem:[#allocation2] sm:$0xff]
      %v232 = vld [vmem:[#allocation2 + $0x8] sm:$0xf]
      %v235 = vcombine.low %v231, %v231
      %v236 = vcombine.low %v232, %v232
      %237 = vrot.lane.b32.xlu0 %v235, 16
      %v238 = vpop.permute.xlu0 %237
      %239 = vrot.lane.b32.xlu0 %v231, 16
      %v240 = vpop.permute.xlu0 %239
      %241 = vrot.lane.b32.xlu0 %v236, 16
      %v242 = vpop.permute.xlu0 %241
      %vm243 = vcmask 130048
      %v244 = vsel %vm243, %v238, %v240
      %v245 = vsel %vm243, %v240, %v242
      %248 = vst [vmem:[#allocation4] sm:$0xf0] %v244
      %249 = vst [vmem:[#allocation4 + $0x8] sm:$0xf0] %v245
      %v250 = vld [vmem:[#allocation2] sm:$0xff]
      %v251 = vld [vmem:[#allocation2 + $0x8] sm:$0xf]
      %v252 = vsel %vm201, 1, 0
      %v253 = vsel %vm202, 1, 0
      %vm254 = vcmp.eq.s32.totalorder %v252, 1
      %vm255 = vcmp.eq.s32.totalorder %v253, 1
      %v258 = vcombine.high %v250, %v250
      %259 = vrot.lane.b32.xlu0 %v250, 15
      %v260 = vpop.permute.xlu0 %259
      %261 = vrot.lane.b32.xlu0 %v258, 15
      %v262 = vpop.permute.xlu0 %261
      %263 = vrot.lane.b32.xlu0 %v251, 15
      %v264 = vpop.permute.xlu0 %263
      %vm265 = vcmask 121856
      %v266 = vsel %vm265, %v260, %v262
      %v267 = vsel %vm265, %v262, %v264
      %v270 = vsel %vm254, %v266, 0.0
      %v271 = vsel %vm255, %v267, 0.0
      %272 = vst [vmem:[#allocation4 + $0x10] sm:$0xf] %v270
      %273 = vst [vmem:[#allocation4 + $0x18] sm:$0xf] %v271
      %v274 = vld [vmem:[#allocation2] sm:$0xff]
      %v275 = vld [vmem:[#allocation2 + $0x8] sm:$0xf]
      %v278 = vcombine.high %v274, %v274
      %279 = vrot.lane.b32.xlu0 %v274, 1
      %v280 = vpop.permute.xlu0 %279
      %281 = vrot.lane.b32.xlu0 %v278, 1
      %v282 = vpop.permute.xlu0 %281
      %283 = vrot.lane.b32.xlu0 %v275, 1
      %v284 = vpop.permute.xlu0 %283
      %vm285 = vcmask 7168
      %v286 = vsel %vm285, %v280, %v282
      %v287 = vsel %vm285, %v282, %v284
      %v290 = vsel %vm211, %v286, 0.0
      %v291 = vsel %vm212, %v287, 0.0
      %v294 = vrot.slane %v290, 4
      %v295 = vrot.slane %v291, 4
      %298 = vst [vmem:[#allocation4 + $0x10] sm:$0xf0] %v294
      %299 = vst [vmem:[#allocation4 + $0x18] sm:$0xf0] %v295
      %v300 = vld [vmem:[#allocation2 + $0x4] sm:$0xff]
      %v302 = vcombine.high %v300, %v300
      %304 = vst [vmem:[#allocation4 + $0x20] sm:$0xf] %v300
      %305 = vst [vmem:[#allocation4 + $0x28] sm:$0xf] %v302
      %v306 = vld [vmem:[#allocation2 + $0x4] sm:$0xff]
      %v307 = vld [vmem:[#allocation2 + $0xc] sm:$0xf]
      %v310 = vcombine.high %v306, %v306
      %311 = vrot.lane.b32.xlu0 %v306, 127
      %v312 = vpop.permute.xlu0 %311
      %313 = vrot.lane.b32.xlu0 %v310, 127
      %v314 = vpop.permute.xlu0 %313
      %315 = vrot.lane.b32.xlu0 %v307, 127
      %v316 = vpop.permute.xlu0 %315
      %vm317 = vcmask 1039360
      %v318 = vsel %vm317, %v312, %v314
      %v319 = vsel %vm317, %v314, %v316
      %v322 = vsel %vm254, %v318, 0.0
      %v323 = vsel %vm255, %v319, 0.0
      %v326 = vrot.slane %v322, 4
      %v327 = vrot.slane %v323, 4
      %330 = vst [vmem:[#allocation4 + $0x20] sm:$0xf0] %v326
      %331 = vst [vmem:[#allocation4 + $0x28] sm:$0xf0] %v327
      %v332 = vld [vmem:[#allocation2 + $0x4] sm:$0xff]
      %v333 = vld [vmem:[#allocation2 + $0xc] sm:$0xf]
      %v336 = vcombine.high %v332, %v332
      %337 = vrot.lane.b32.xlu0 %v332, 113
      %v338 = vpop.permute.xlu0 %337
      %339 = vrot.lane.b32.xlu0 %v336, 113
      %v340 = vpop.permute.xlu0 %339
      %341 = vrot.lane.b32.xlu0 %v333, 113
      %v342 = vpop.permute.xlu0 %341
      %vm343 = vcmask 924672
      %v344 = vsel %vm343, %v338, %v340
      %v345 = vsel %vm343, %v340, %v342
      %v348 = vsel %vm211, %v344, 0.0
      %v349 = vsel %vm212, %v345, 0.0
      %350 = vst [vmem:[#allocation4 + $0x30] sm:$0xf] %v348
      %351 = vst [vmem:[#allocation4 + $0x38] sm:$0xf] %v349
      %v352 = vld [vmem:[#allocation2 + $0x4] sm:$0xff]
      %v353 = vld [vmem:[#allocation2 + $0xc] sm:$0xf]
      %v356 = vcombine.low %v352, %v352
      %v357 = vcombine.low %v353, %v353
      %358 = vrot.lane.b32.xlu0 %v356, 112
      %v359 = vpop.permute.xlu0 %358
      %360 = vrot.lane.b32.xlu0 %v352, 112
      %v361 = vpop.permute.xlu0 %360
      %362 = vrot.lane.b32.xlu0 %v357, 112
      %v363 = vpop.permute.xlu0 %362
      %vm364 = vcmask 916480
      %v365 = vsel %vm364, %v359, %v361
      %v366 = vsel %vm364, %v361, %v363
      %369 = vst [vmem:[#allocation4 + $0x30] sm:$0xf0] %v365
      %370 = vst [vmem:[#allocation4 + $0x38] sm:$0xf0] %v366
      %v371 = vld [vmem:[#allocation2 + $0x4] sm:$0xff]
      %v372 = vld [vmem:[#allocation2 + $0xc] sm:$0xf]
      %v375 = vcombine.high %v371, %v371
      %376 = vrot.lane.b32.xlu0 %v371, 111
      %v377 = vpop.permute.xlu0 %376
      %378 = vrot.lane.b32.xlu0 %v375, 111
      %v379 = vpop.permute.xlu0 %378
      %380 = vrot.lane.b32.xlu0 %v372, 111
      %v381 = vpop.permute.xlu0 %380
      %vm382 = vcmask 908288
      %v383 = vsel %vm382, %v377, %v379
      %v384 = vsel %vm382, %v379, %v381
      %v387 = vsel %vm254, %v383, 0.0
      %v388 = vsel %vm255, %v384, 0.0
      %389 = vst [vmem:[#allocation4 + $0x40] sm:$0xf] %v387
      %390 = vst [vmem:[#allocation4 + $0x48] sm:$0xf] %v388
      %v391 = vlaneseq
      %vm392 = vcmp.ge.s32.totalorder %v391, 0
      %vm393 = vcmp.lt.s32.totalorder %v391, 256
      %vm394 = vmand %vm392, %vm393
      %s395 = scalar_lea.vmem [#allocation4], 68
      %396 = vst.msk [vmem:[%s395] ss:$8 sm:$0x3] %vm394, 1.0
      %397 = vst.msk [vmem:[%s395] ss:$8 sm:$0x0] %vm394, 1.0
      %v398 = vld [vmem:[%s1] sm:$0xf]
      %v399 = vld [vmem:[#allocation4] sm:$0xff]
      %v400 = vld [vmem:[#allocation4 + $0x8] sm:$0xff]
      %v401 = vld [vmem:[#allocation4 + $0x10] sm:$0xff]
      %v402 = vld [vmem:[#allocation4 + $0x18] sm:$0xff]
      %v403 = vld [vmem:[#allocation4 + $0x20] sm:$0xff]
      %v404 = vld [vmem:[#allocation4 + $0x28] sm:$0xff]
      %v405 = vld [vmem:[#allocation4 + $0x30] sm:$0xff]
      %v406 = vld [vmem:[#allocation4 + $0x38] sm:$0xff]
      %v407 = vld [vmem:[#allocation4 + $0x40] sm:$0x1f]
      %v408 = vld [vmem:[#allocation4 + $0x48] sm:$0x1f]
      %v409 = vpack.c.bf16 %v401, %v399
      %v410 = vpack.c.bf16 %v402, %v400
      %v411 = vpack.c.bf16 %v405, %v403
      %v412 = vpack.c.bf16 %v406, %v404
      %v413 = vpack.c.bf16 %v407, %v407
      %v414 = vpack.c.bf16 %v408, %v408
      %vm415 = vcmask 302080
      %v417 = vsel %vm415, %v398, 0
      %vm419 = vcmask 1041408
      %vm420 = vcmask 1042432
      %v421 = vsel %vm419, 4294967295, 65535
      %v422 = vsel %vm420, %v421, 0
      %v424 = vand.u32 %v413, %v422
      %v427 = vand.u32 %v414, %v422
      %429 = vmatprep.subr.bf16.mxu0 0
      %430 = vmatpush1.bf16.msra.mxu0 0
      %431 = vmatprep.subr.bf16.mxu0 0
      %432 = vmatpush1.bf16.msra.mxu0 0
      %433 = vmatprep.subr.bf16.mxu0 0
      %434 = vmatpush1.bf16.msra.mxu0 0
      %435 = vmatprep.subr.bf16.mxu0 0
      %436 = vmatpush1.bf16.msra.mxu0 0
      %437 = vmatprep.subr.bf16.mxu0 0
      %438 = vmatpush1.bf16.msra.mxu0 0
      %439 = vmatprep.subr.bf16.mxu0 %v427
      %440 = vmatpush1.bf16.msra.mxu0 %v424
      %441 = vmatprep.subr.bf16.mxu0 %v412
      %442 = vmatpush1.bf16.msra.mxu0 %v411
      %443 = vmatprep.subr.bf16.mxu0 %v410
      %444 = vmatpush1.bf16.msra.mxu0 %v409
      %445 = vmatprep.subr.bf16.mxu0 0
      %446 = vmatpush2.bf16.msra.mxu0 0
      %447 = vmatprep.subr.bf16.mxu0 0
      %448 = vmatpush2.bf16.msra.mxu0 0
      %449 = vmatprep.subr.bf16.mxu0 0
      %450 = vmatpush2.bf16.msra.mxu0 0
      %451 = vmatprep.subr.bf16.mxu0 0
      %452 = vmatpush2.bf16.msra.mxu0 0
      %453 = vmatprep.subr.bf16.mxu0 0
      %454 = vmatpush2.bf16.msra.mxu0 0
      %455 = vmatprep.subr.bf16.mxu0 0
      %456 = vmatpush2.bf16.msra.mxu0 0
      %457 = vmatprep.subr.bf16.mxu0 0
      %458 = vmatpush2.bf16.msra.mxu0 0
      %459 = vmatprep.subr.bf16.mxu0 0
      %460 = vmatpush2.bf16.msra.mxu0 0
      %461 = vmatprep.mubr.bf16.mxu0 0
      %462 = vmatmul.mubr.bf16.gmra.mxu0 %v417
      %v463 = vpop.f32.mrf.mxu0
      %v464 = vadd.f32 0.0, %v463
      %v465 = vpop.f32.mrf.mxu0
      %v466 = vadd.f32 0.0, %v465
      %v467 = vpop.f32.mrf.mxu0
      %v468 = vpop.f32.mrf.mxu0
      %469 = vdwg.mxu0
      %v470 = vmax.f32 %v464, 0.0
      %v471 = vmax.f32 %v466, 0.0
      %472 = vst [vmem:[#allocation3] sm:$0xff] 0.0
      %473 = vst [vmem:[#allocation3 + $0x8] sm:$0xff] 0.0
      %474 = vst [vmem:[#allocation3 + $0x10] sm:$0xff] 0.0
      %475 = vst [vmem:[#allocation3 + $0x18] sm:$0xff] 0.0
      %476 = vst [vmem:[#allocation3 + $0x8] sm:$0xff] %v470
      %477 = vst [vmem:[#allocation3 + $0x10] sm:$0xff] %v471
      %v478 = vld [vmem:[#allocation3] sm:$0xff]
      %v479 = vld [vmem:[#allocation3 + $0x8] sm:$0xff]
      %v480 = vld [vmem:[#allocation3 + $0x10] sm:$0xff]
      %484 = vrot.lane.b32.xlu0 %v478, 17
      %v485 = vpop.permute.xlu0 %484
      %486 = vrot.lane.b32.xlu0 %v479, 17
      %v487 = vpop.permute.xlu0 %486
      %488 = vrot.lane.b32.xlu0 %v480, 17
      %v489 = vpop.permute.xlu0 %488
      %v490 = vsel %vm222, %v485, %v487
      %v491 = vsel %vm222, %v487, %v489
      %v494 = vsel %vm211, %v490, 0.0
      %v495 = vsel %vm212, %v491, 0.0
      %496 = vst [vmem:[#allocation5] sm:$0xff] %v494
      %497 = vst [vmem:[#allocation5 + $0x8] sm:$0xff] %v495
      %v498 = vld [vmem:[#allocation3] sm:$0xff]
      %v499 = vld [vmem:[#allocation3 + $0x8] sm:$0xff]
      %v500 = vld [vmem:[#allocation3 + $0x10] sm:$0xff]
      %504 = vrot.lane.b32.xlu0 %v498, 16
      %v505 = vpop.permute.xlu0 %504
      %506 = vrot.lane.b32.xlu0 %v499, 16
      %v507 = vpop.permute.xlu0 %506
      %508 = vrot.lane.b32.xlu0 %v500, 16
      %v509 = vpop.permute.xlu0 %508
      %v510 = vsel %vm243, %v505, %v507
      %v511 = vsel %vm243, %v507, %v509
      %514 = vst [vmem:[#allocation5 + $0x10] sm:$0xff] %v510
      %515 = vst [vmem:[#allocation5 + $0x18] sm:$0xff] %v511
      %v516 = vld [vmem:[#allocation3] sm:$0xff]
      %v517 = vld [vmem:[#allocation3 + $0x8] sm:$0xff]
      %v518 = vld [vmem:[#allocation3 + $0x10] sm:$0xff]
      %522 = vrot.lane.b32.xlu0 %v516, 15
      %v523 = vpop.permute.xlu0 %522
      %524 = vrot.lane.b32.xlu0 %v517, 15
      %v525 = vpop.permute.xlu0 %524
      %526 = vrot.lane.b32.xlu0 %v518, 15
      %v527 = vpop.permute.xlu0 %526
      %v528 = vsel %vm265, %v523, %v525
      %v529 = vsel %vm265, %v525, %v527
      %v532 = vsel %vm254, %v528, 0.0
      %v533 = vsel %vm255, %v529, 0.0
      %534 = vst [vmem:[#allocation5 + $0x20] sm:$0xff] %v532
      %535 = vst [vmem:[#allocation5 + $0x28] sm:$0xff] %v533
      %v536 = vld [vmem:[#allocation3] sm:$0xff]
      %v537 = vld [vmem:[#allocation3 + $0x8] sm:$0xff]
      %v538 = vld [vmem:[#allocation3 + $0x10] sm:$0xff]
      %542 = vrot.lane.b32.xlu0 %v536, 1
      %v543 = vpop.permute.xlu0 %542
      %544 = vrot.lane.b32.xlu0 %v537, 1
      %v545 = vpop.permute.xlu0 %544
      %546 = vrot.lane.b32.xlu0 %v538, 1
      %v547 = vpop.permute.xlu0 %546
      %v548 = vsel %vm285, %v543, %v545
      %v549 = vsel %vm285, %v545, %v547
      %v552 = vsel %vm211, %v548, 0.0
      %v553 = vsel %vm212, %v549, 0.0
      %554 = vst [vmem:[#allocation5 + $0x30] sm:$0xff] %v552
      %555 = vst [vmem:[#allocation5 + $0x38] sm:$0xff] %v553
      %v556 = vld [vmem:[#allocation3 + $0x8] sm:$0xff]
      %v557 = vld [vmem:[#allocation3 + $0x10] sm:$0xff]
      %558 = vst [vmem:[#allocation5 + $0x40] sm:$0xff] %v556
      %559 = vst [vmem:[#allocation5 + $0x48] sm:$0xff] %v557
      %v560 = vld [vmem:[#allocation3 + $0x8] sm:$0xff]
      %v561 = vld [vmem:[#allocation3 + $0x10] sm:$0xff]
      %v562 = vld [vmem:[#allocation3 + $0x18] sm:$0xff]
      %566 = vrot.lane.b32.xlu0 %v560, 127
      %v567 = vpop.permute.xlu0 %566
      %568 = vrot.lane.b32.xlu0 %v561, 127
      %v569 = vpop.permute.xlu0 %568
      %570 = vrot.lane.b32.xlu0 %v562, 127
      %v571 = vpop.permute.xlu0 %570
      %v572 = vsel %vm317, %v567, %v569
      %v573 = vsel %vm317, %v569, %v571
      %v576 = vsel %vm254, %v572, 0.0
      %v577 = vsel %vm255, %v573, 0.0
      %578 = vst [vmem:[#allocation5 + $0x50] sm:$0xff] %v576
      %579 = vst [vmem:[#allocation5 + $0x58] sm:$0xff] %v577
      %v580 = vld [vmem:[#allocation3 + $0x8] sm:$0xff]
      %v581 = vld [vmem:[#allocation3 + $0x10] sm:$0xff]
      %v582 = vld [vmem:[#allocation3 + $0x18] sm:$0xff]
      %586 = vrot.lane.b32.xlu0 %v580, 113
      %v587 = vpop.permute.xlu0 %586
      %588 = vrot.lane.b32.xlu0 %v581, 113
      %v589 = vpop.permute.xlu0 %588
      %590 = vrot.lane.b32.xlu0 %v582, 113
      %v591 = vpop.permute.xlu0 %590
      %v592 = vsel %vm343, %v587, %v589
      %v593 = vsel %vm343, %v589, %v591
      %v596 = vsel %vm211, %v592, 0.0
      %v597 = vsel %vm212, %v593, 0.0
      %598 = vst [vmem:[#allocation5 + $0x60] sm:$0xff] %v596
      %599 = vst [vmem:[#allocation5 + $0x68] sm:$0xff] %v597
      %v600 = vld [vmem:[#allocation3 + $0x8] sm:$0xff]
      %v601 = vld [vmem:[#allocation3 + $0x10] sm:$0xff]
      %v602 = vld [vmem:[#allocation3 + $0x18] sm:$0xff]
      %606 = vrot.lane.b32.xlu0 %v600, 112
      %v607 = vpop.permute.xlu0 %606
      %608 = vrot.lane.b32.xlu0 %v601, 112
      %v609 = vpop.permute.xlu0 %608
      %610 = vrot.lane.b32.xlu0 %v602, 112
      %v611 = vpop.permute.xlu0 %610
      %v612 = vsel %vm364, %v607, %v609
      %v613 = vsel %vm364, %v609, %v611
      %616 = vst [vmem:[#allocation5 + $0x70] sm:$0xff] %v612
      %617 = vst [vmem:[#allocation5 + $0x78] sm:$0xff] %v613
      %v618 = vld [vmem:[#allocation3 + $0x8] sm:$0xff]
      %v619 = vld [vmem:[#allocation3 + $0x10] sm:$0xff]
      %v620 = vld [vmem:[#allocation3 + $0x18] sm:$0xff]
      %624 = vrot.lane.b32.xlu0 %v618, 111
      %v625 = vpop.permute.xlu0 %624
      %626 = vrot.lane.b32.xlu0 %v619, 111
      %v627 = vpop.permute.xlu0 %626
      %628 = vrot.lane.b32.xlu0 %v620, 111
      %v629 = vpop.permute.xlu0 %628
      %v630 = vsel %vm382, %v625, %v627
      %v631 = vsel %vm382, %v627, %v629
      %v634 = vsel %vm254, %v630, 0.0
      %v635 = vsel %vm255, %v631, 0.0
      %636 = vst [vmem:[#allocation5 + $0x80] sm:$0xff] %v634
      %637 = vst [vmem:[#allocation5 + $0x88] sm:$0xff] %v635
      %s638 = scalar_lea.vmem [#allocation5], 144
      %639 = vst.msk [vmem:[%s638] ss:$8 sm:$0x3] %vm394, 1.0
      %640 = vst.msk [vmem:[%s638] ss:$8 sm:$0x0] %vm394, 1.0
      %v641 = vld [vmem:[%s2] sm:$0x3]
      %v642 = vld [vmem:[#allocation5] sm:$0xff]
      %v643 = vld [vmem:[#allocation5 + $0x8] sm:$0xff]
      %v644 = vld [vmem:[#allocation5 + $0x10] sm:$0xff]
      %v645 = vld [vmem:[#allocation5 + $0x18] sm:$0xff]
      %v646 = vld [vmem:[#allocation5 + $0x20] sm:$0xff]
      %v647 = vld [vmem:[#allocation5 + $0x28] sm:$0xff]
      %v648 = vld [vmem:[#allocation5 + $0x30] sm:$0xff]
      %v649 = vld [vmem:[#allocation5 + $0x38] sm:$0xff]
      %v650 = vld [vmem:[#allocation5 + $0x40] sm:$0xff]
      %v651 = vld [vmem:[#allocation5 + $0x48] sm:$0xff]
      %v652 = vld [vmem:[#allocation5 + $0x50] sm:$0xff]
      %v653 = vld [vmem:[#allocation5 + $0x58] sm:$0xff]
      %v654 = vld [vmem:[#allocation5 + $0x60] sm:$0xff]
      %v655 = vld [vmem:[#allocation5 + $0x68] sm:$0xff]
      %v656 = vld [vmem:[#allocation5 + $0x70] sm:$0xff]
      %v657 = vld [vmem:[#allocation5 + $0x78] sm:$0xff]
      %v658 = vld [vmem:[#allocation5 + $0x80] sm:$0xff]
      %v659 = vld [vmem:[#allocation5 + $0x88] sm:$0xff]
      %v660 = vld [vmem:[#allocation5 + $0x90] sm:$0x1]
      %v661 = vld [vmem:[#allocation5 + $0x98] sm:$0x1]
      %v662 = vpack.c.bf16 %v644, %v642
      %v663 = vpack.c.bf16 %v645, %v643
      %v664 = vpack.c.bf16 %v648, %v646
      %v665 = vpack.c.bf16 %v649, %v647
      %v666 = vpack.c.bf16 %v652, %v650
      %v667 = vpack.c.bf16 %v653, %v651
      %v668 = vpack.c.bf16 %v656, %v654
      %v669 = vpack.c.bf16 %v657, %v655
      %v670 = vpack.c.bf16 %v660, %v658
      %v671 = vpack.c.bf16 %v661, %v659
      %vm672 = vcmask 596992
      %v674 = vsel %vm672, %v641, 0
      %vm676 = vcmask 1043456
      %vm677 = vcmask 1044480
      %v678 = vsel %vm676, 4294967295, 65535
      %v679 = vsel %vm677, %v678, 0
      %v681 = vand.u32 %v670, %v679
      %v684 = vand.u32 %v671, %v679
      %686 = vmatprep.subr.bf16.mxu0 0
      %687 = vmatpush1.bf16.msra.mxu0 0
      %688 = vmatprep.subr.bf16.mxu0 0
      %689 = vmatpush1.bf16.msra.mxu0 0
      %690 = vmatprep.subr.bf16.mxu0 0
      %691 = vmatpush1.bf16.msra.mxu0 0
      %692 = vmatprep.subr.bf16.mxu0 %v684
      %693 = vmatpush1.bf16.msra.mxu0 %v681
      %694 = vmatprep.subr.bf16.mxu0 %v669
      %695 = vmatpush1.bf16.msra.mxu0 %v668
      %696 = vmatprep.subr.bf16.mxu0 %v667
      %697 = vmatpush1.bf16.msra.mxu0 %v666
      %698 = vmatprep.subr.bf16.mxu0 %v665
      %699 = vmatpush1.bf16.msra.mxu0 %v664
      %700 = vmatprep.subr.bf16.mxu0 %v663
      %701 = vmatpush1.bf16.msra.mxu0 %v662
      %702 = vmatprep.subr.bf16.mxu0 0
      %703 = vmatpush2.bf16.msra.mxu0 0
      %704 = vmatprep.subr.bf16.mxu0 0
      %705 = vmatpush2.bf16.msra.mxu0 0
      %706 = vmatprep.subr.bf16.mxu0 0
      %707 = vmatpush2.bf16.msra.mxu0 0
      %708 = vmatprep.subr.bf16.mxu0 0
      %709 = vmatpush2.bf16.msra.mxu0 0
      %710 = vmatprep.subr.bf16.mxu0 0
      %711 = vmatpush2.bf16.msra.mxu0 0
      %712 = vmatprep.subr.bf16.mxu0 0
      %713 = vmatpush2.bf16.msra.mxu0 0
      %714 = vmatprep.subr.bf16.mxu0 0
      %715 = vmatpush2.bf16.msra.mxu0 0
      %716 = vmatprep.subr.bf16.mxu0 0
      %717 = vmatpush2.bf16.msra.mxu0 0
      %718 = vmatprep.mubr.bf16.mxu0 0
      %719 = vmatmul.mubr.bf16.gmra.mxu0 %v674
      %v720 = vpop.f32.mrf.mxu0
      %v721 = vadd.f32 0.0, %v720
      %v722 = vpop.f32.mrf.mxu0
      %v723 = vadd.f32 0.0, %v722
      %v724 = vpop.f32.mrf.mxu0
      %v725 = vpop.f32.mrf.mxu0
      %726 = vdwg.mxu0
      %v729 = vcombine.low %v721, %v723
      %731 = vst [vmem:[%s170] sm:$0x77] %v729
      %p732 = scmp.lt.s32.totalorder %s14, 1
      %s733 = scalar_select %p732, %s14, 1
      %s734 = smul.addr %s733, 2
      %s735 = smul.addr %s734, 4
      %s736 = scalar_lea.vmem %s3, %s735
      // Predicated region
      $region33: #{_encdec_forward.1} parent=31 // pred_check
        %p737 = pneg %p100
      $region34: #{_encdec_forward.1} parent=31 // pred_check_branch
        %739 = sbr.rel (%p737) target = $region36
      $region35: #{_encdec_forward.1} parent=31 // pred_region
        _
      $region36: #{_encdec_forward.1} parent=31 // pred_fallthru
        _
    $region32: #{_encdec_forward.1} parent=5 // pred_fallthru
      _
    %p740 = scmp.le.s32.totalorder 2, %s9
    // Predicated region
    $region37: #{_encdec_forward.1} parent=5 // pred_check
      %p741 = pneg %p740
    $region38: #{_encdec_forward.1} parent=5 // pred_check_branch
      %743 = sbr.rel (%p741) target = $region40
    $region39: #{_encdec_forward.1} parent=5 // pred_region
      %s744 = ssub.s32 %s9, 2
      // Predicated region
      $region41: #{_encdec_forward.1} parent=39 // pred_check
        %p745 = pneg %p106
      $region42: #{_encdec_forward.1} parent=39 // pred_check_branch
        %747 = sbr.rel (%p745) target = $region44
      $region43: #{_encdec_forward.1} parent=39 // pred_region
        %p748 = scmp.lt.s32.totalorder %s15, 1
        %s749 = scalar_select %p748, %s15, 1
        %s750 = smul.addr %s749, 2
        %s751 = smul.addr %s750, 4
        %s752 = scalar_lea.vmem %s3, %s751
      $region44: #{_encdec_forward.1} parent=39 // pred_fallthru
        _
    $region40: #{_encdec_forward.1} parent=5 // pred_fallthru
      _
  $region6: #{_encdec_forward.1} parent=0 // loop_footer
    %s13 = sadd.s32 1, %s9
  $region7: #{_encdec_forward.1} parent=0 // loop_footer_branch
    %8 = sbr.rel target = $region3
  $region8: #{_encdec_forward.1} parent=0 // loop_exit
    _

</llo_original>
